<compile_context>
chip_gen: v7x
topology: tpu7x:2x2x1
jax: 0.10.0
libtpu: 0.0.40
codegen_flags: <defaults>
</compile_context>

<pallas_src>
from functools import partial

import jax
import jax.numpy as jnp
from jax.experimental import pallas as pl
from jax.experimental.pallas import tpu as pltpu

_OUT_SUB = 8     # sublane size of the per-block partial-sum output tile
_OUT_LANE = 128  # lane size of the per-block partial-sum output tile


def _cwd_block_kernel(s_ref, t_ref, out_ref, *, inv_tau, rows_total,
                      block_rows, mask_rows):
    """One grid step: a (block_rows, HW) slab of rows (row = one (n, c) pair).

    Writes  sum_rows sum_hw p_t * (log_p_t - log_p_s)  for this slab,
    broadcast over an (8, 128) output tile (lane-dense, unmasked store).
    """
    s = s_ref[...].astype(jnp.float32)
    t = t_ref[...].astype(jnp.float32)

    # Teacher: one exp pass feeds both softmax (p_t) and log_softmax.
    t_max = jnp.max(t, axis=1, keepdims=True)
    z_t = t - t_max
    if inv_tau != 1.0:
        z_t = z_t * inv_tau
    e_t = jnp.exp(z_t)                                   # EUP pass 1
    denom_t = jnp.sum(e_t, axis=1, keepdims=True)        # per-row reduce (XLU)
    log_den_t = jnp.log(denom_t)                         # per-row scalars only

    # Student: only log_softmax is needed.
    s_max = jnp.max(s, axis=1, keepdims=True)
    z_s = s - s_max
    if inv_tau != 1.0:
        z_s = z_s * inv_tau
    e_s = jnp.exp(z_s)                                   # EUP pass 2
    log_den_s = jnp.log(jnp.sum(e_s, axis=1, keepdims=True))

    # sum_hw p_t * (log_p_t - log_p_s)
    #   = (1/denom_t) * sum_hw e_t * ((z_t - z_s) - (log_den_t - log_den_s))
    diff = (z_t - z_s) - (log_den_t - log_den_s)
    inner = jnp.sum(e_t * diff, axis=1, keepdims=True)   # (block_rows, 1)
    per_row = inner / denom_t                            # (block_rows, 1)

    if mask_rows:
        # Cheap PER-ROW mask for the padded tail of the last block; applied
        # before the sum so garbage/NaN rows are selected away.
        row0 = pl.program_id(0) * block_rows
        rid = row0 + jax.lax.broadcasted_iota(jnp.int32, per_row.shape, 0)
        per_row = jnp.where(rid < rows_total, per_row, 0.0)

    cost = jnp.sum(per_row)
    out_ref[...] = jnp.full((_OUT_SUB, _OUT_LANE), cost, jnp.float32)


def _vmem_plan():
    """(working-set budget, vmem_limit_bytes) sized per TPU generation."""
    try:
        cap = pltpu.get_tpu_info().vmem_capacity_bytes
    except Exception:
        cap = None
    if cap is not None and cap >= 96 * 1024 * 1024:
        # v5e / v6e: 128 MiB physical VMEM per TensorCore.
        return 40 * 1024 * 1024, 64 * 1024 * 1024
    # v7x (64 MiB per TC) or unknown: stay conservative.
    return 20 * 1024 * 1024, 48 * 1024 * 1024


def _choose_row_block(rows, hw, itemsize, vmem_budget_bytes,
                      max_block_rows=2048):
    """Largest safe row-block, preferring >= 2 blocks (v7x dual-TC sharding).

    Per row we hold 2 double-buffered input blocks (HBM dtype) plus ~7 live
    f32 intermediates of the same width (cast s/t, z_t, e_t, z_s, e_s, diff).
    Returns None if even an 8-row block exceeds the budget (large-HW guard).
    """
    bytes_per_row = hw * (2 * 2 * itemsize + 7 * 4)
    cap = vmem_budget_bytes // max(bytes_per_row, 1)
    if cap < 8:
        return None
    if rows <= 8:
        return int(rows)            # full-dim block is always layout-legal
    # Aim for >= 2 blocks so the "parallel" grid axis can use both v7x TCs;
    # the extra grid step is negligible (~0.35 us) on single-TC v5e/v6e.
    half = ((-(-rows // 2) + 7) // 8) * 8
    br = min(int(max_block_rows), int((cap // 8) * 8), int(half))
    return int(max(8, br))


def _stage_loss_ref(s, t, tau):
    """Pure-JAX fallback for a single stage (used only when HW is too large)."""
    N, C, H, W = s.shape
    t2 = t.reshape(-1, H * W).astype(jnp.float32) / tau
    s2 = s.reshape(-1, H * W).astype(jnp.float32) / tau
    p_t = jax.nn.softmax(t2, axis=1)
    cost = jnp.sum(
        p_t * (jax.nn.log_softmax(t2, axis=1) - jax.nn.log_softmax(s2, axis=1))
    ) * (tau ** 2)
    return cost / (C * N)


def cwd_stage_loss(s, t, tau=1.0, *, block_rows=None, vmem_budget_bytes=None):
    """One distillation stage.  s, t: (N, C, H, W) with identical shapes."""
    assert s.shape == t.shape, (s.shape, t.shape)
    N, C, H, W = s.shape
    HW = H * W
    R = N * C

    budget, vmem_limit = _vmem_plan()
    if vmem_budget_bytes is not None:
        budget = vmem_budget_bytes

    if block_rows is None:
        block_rows = _choose_row_block(R, HW, jnp.dtype(s.dtype).itemsize,
                                       budget)
    if block_rows is None:
        # Feature map too large for a single-pass row in VMEM.
        # TODO(synk): streaming online-softmax over HW instead of fallback.
        return _stage_loss_ref(s, t, tau)

    # Free contiguous reshapes (no transpose / HBM relayout).
    s2 = s.reshape(R, HW)
    t2 = t.reshape(R, HW)

    num_blocks = pl.cdiv(R, block_rows)
    mask_rows = (R % block_rows) != 0

    kernel = partial(_cwd_block_kernel,
                     inv_tau=1.0 / float(tau),
                     rows_total=R,
                     block_rows=block_rows,
                     mask_rows=mask_rows)

    partials = pl.pallas_call(
        kernel,
        out_shape=jax.ShapeDtypeStruct((num_blocks * _OUT_SUB, _OUT_LANE),
                                       jnp.float32),
        grid=(num_blocks,),
        in_specs=[
            pl.BlockSpec((block_rows, HW), lambda i: (i, 0)),
            pl.BlockSpec((block_rows, HW), lambda i: (i, 0)),
        ],
        out_specs=pl.BlockSpec((_OUT_SUB, _OUT_LANE), lambda i: (i, 0)),
        compiler_params=pltpu.CompilerParams(
            dimension_semantics=("parallel",),      # shard blocks across TCs
            vmem_limit_bytes=vmem_limit,
        ),
    )(s2, t2)

    # One scalar per grid step lives at [i*8, 0]; tiny final reduce in XLA.
    stage_sum = jnp.sum(partials[::_OUT_SUB, 0])
    return stage_sum * (float(tau) ** 2) / (C * N)


class CWDLoss:
    """JAX/Pallas port of the PyTorch CWDLoss module (forward only)."""

    def __init__(self, channels_s=None, channels_t=None, tau=1.0):
        # channels_s / channels_t are unused, kept for signature parity.
        self.tau = float(tau)

    def __call__(self, y_s, y_t):
        assert len(y_s) == len(y_t)
        total = jnp.float32(0.0)
        for s, t in zip(y_s, y_t):
            assert s.shape == t.shape
            total = total + cwd_stage_loss(s, t, self.tau)
        return total


def _reference_loss(y_s, y_t, tau=1.0):
    """Pure-JAX mirror of the PyTorch forward."""
    total = jnp.float32(0.0)
    for s, t in zip(y_s, y_t):
        total = total + _stage_loss_ref(s, t, tau)
    return total


if __name__ == "__main__":
    key = jax.random.PRNGKey(0)
    shapes = [(2, 4, 16, 16), (2, 8, 8, 8)]        # two stages, (N, C, H, W)
    ks = jax.random.split(key, 2 * len(shapes) + 2)

    y_s = [jax.random.normal(ks[2 * i], shp, jnp.float32)
           for i, shp in enumerate(shapes)]
    y_t = [jax.random.normal(ks[2 * i + 1], shp, jnp.float32)
           for i, shp in enumerate(shapes)]

    tau = 2.0
    loss_fn = CWDLoss(channels_s=[4, 8], channels_t=[4, 8], tau=tau)

    loss = jax.block_until_ready(loss_fn(y_s, y_t))
    ref = jax.block_until_ready(_reference_loss(y_s, y_t, tau=tau))
    assert jnp.isfinite(loss), "kernel produced non-finite loss"
    assert jnp.allclose(loss, ref, rtol=1e-4, atol=1e-5), (loss, ref)

    # Extra check: multi-block grid with a masked (padded) last row-block.
    s3 = jax.random.normal(ks[-2], (2, 10, 8, 8), jnp.float32)
    t3 = jax.random.normal(ks[-1], (2, 10, 8, 8), jnp.float32)
    l3 = jax.block_until_ready(cwd_stage_loss(s3, t3, tau=1.0, block_rows=8))
    r3 = jax.block_until_ready(_reference_loss([s3], [t3], tau=1.0))
    assert jnp.allclose(l3, r3, rtol=1e-4, atol=1e-5), (l3, r3)

    print("KERNEL_OK")
</pallas_src>

<mosaic_0001>
module attributes {stable_mosaic.version = 11 : i64} {
  func.func @_cwd_block_kernel(%arg0: i32, %arg1: memref<8x256xf32, #tpu.memory_space<vmem>>, %arg2: memref<8x256xf32, #tpu.memory_space<vmem>>, %arg3: memref<8x128xf32, #tpu.memory_space<vmem>>) attributes {dimension_semantics = [#tpu.dimension_semantics<parallel>], iteration_bounds = array<i64: 1>, scalar_prefetch = 0 : i64, scratch_operands = 0 : i64, tpu.core_type = #tpu.core_type<tc>, window_params = [{transform_indices = @transform_0, window_bounds = array<i64: 8, 256>}, {transform_indices = @transform_1, window_bounds = array<i64: 8, 256>}, {transform_indices = @transform_2, window_bounds = array<i64: 8, 128>}]} {
    %c0 = arith.constant 0 : index
    %c0_0 = arith.constant 0 : index
    %0 = vector.load %arg1[%c0, %c0_0] : memref<8x256xf32, #tpu.memory_space<vmem>>, vector<8x256xf32>
    %c0_1 = arith.constant 0 : index
    %c0_2 = arith.constant 0 : index
    %1 = vector.load %arg2[%c0_1, %c0_2] : memref<8x256xf32, #tpu.memory_space<vmem>>, vector<8x256xf32>
    %cst = arith.constant dense<0xFF800000> : vector<8xf32>
    %2 = vector.multi_reduction <maximumf>, %1, %cst [1] : vector<8x256xf32> to vector<8xf32>
    %3 = vector.shape_cast %2 : vector<8xf32> to vector<8x1xf32>
    %4 = vector.broadcast %3 : vector<8x1xf32> to vector<8x256xf32>
    %5 = arith.subf %1, %4 : vector<8x256xf32>
    %cst_3 = arith.constant 5.000000e-01 : f32
    %6 = vector.broadcast %cst_3 : f32 to vector<8x256xf32>
    %7 = arith.mulf %5, %6 : vector<8x256xf32>
    %8 = math.exp %7 : vector<8x256xf32>
    %cst_4 = arith.constant dense<0.000000e+00> : vector<8xf32>
    %9 = vector.multi_reduction <add>, %8, %cst_4 [1] : vector<8x256xf32> to vector<8xf32>
    %10 = vector.shape_cast %9 : vector<8xf32> to vector<8x1xf32>
    %11 = math.log %10 : vector<8x1xf32>
    %cst_5 = arith.constant dense<0xFF800000> : vector<8xf32>
    %12 = vector.multi_reduction <maximumf>, %0, %cst_5 [1] : vector<8x256xf32> to vector<8xf32>
    %13 = vector.shape_cast %12 : vector<8xf32> to vector<8x1xf32>
    %14 = vector.broadcast %13 : vector<8x1xf32> to vector<8x256xf32>
    %15 = arith.subf %0, %14 : vector<8x256xf32>
    %cst_6 = arith.constant 5.000000e-01 : f32
    %16 = vector.broadcast %cst_6 : f32 to vector<8x256xf32>
    %17 = arith.mulf %15, %16 : vector<8x256xf32>
    %18 = math.exp %17 : vector<8x256xf32>
    %cst_7 = arith.constant dense<0.000000e+00> : vector<8xf32>
    %19 = vector.multi_reduction <add>, %18, %cst_7 [1] : vector<8x256xf32> to vector<8xf32>
    %20 = vector.shape_cast %19 : vector<8xf32> to vector<8x1xf32>
    %21 = math.log %20 : vector<8x1xf32>
    %22 = arith.subf %7, %17 : vector<8x256xf32>
    %23 = arith.subf %11, %21 : vector<8x1xf32>
    %24 = vector.broadcast %23 : vector<8x1xf32> to vector<8x256xf32>
    %25 = arith.subf %22, %24 : vector<8x256xf32>
    %26 = arith.mulf %8, %25 : vector<8x256xf32>
    %cst_8 = arith.constant dense<0.000000e+00> : vector<8xf32>
    %27 = vector.multi_reduction <add>, %26, %cst_8 [1] : vector<8x256xf32> to vector<8xf32>
    %28 = vector.shape_cast %27 : vector<8xf32> to vector<8x1xf32>
    %29 = arith.divf %28, %10 : vector<8x1xf32>
    %30 = vector.shape_cast %29 : vector<8x1xf32> to vector<1x8x1xf32>
    %cst_9 = arith.constant dense<0.000000e+00> : vector<1xf32>
    %31 = vector.multi_reduction <add>, %30, %cst_9 [1, 2] : vector<1x8x1xf32> to vector<1xf32>
    %32 = vector.shape_cast %31 : vector<1xf32> to vector<1x1x1xf32>
    %33 = vector.extract %32[0, 0, 0] : f32 from vector<1x1x1xf32>
    %34 = vector.broadcast %33 : f32 to vector<8x128xf32>
    %c0_10 = arith.constant 0 : index
    %c0_11 = arith.constant 0 : index
    %35 = vector.load %arg3[%c0_10, %c0_11] : memref<8x128xf32, #tpu.memory_space<vmem>>, vector<8x128xf32>
    tpu.vector_store %arg3[%c0_10, %c0_11], %34 {strides = array<i32>} : memref<8x128xf32, #tpu.memory_space<vmem>>, vector<8x128xf32>,
    return
  }
  func.func @transform_0(%arg0: i32) -> (i32, i32) {
    %c0_i32 = arith.constant 0 : i32
    %c0_i32_0 = arith.constant 0 : i32
    return %arg0, %c0_i32 : i32, i32
  }
  func.func @transform_1(%arg0: i32) -> (i32, i32) {
    %c0_i32 = arith.constant 0 : i32
    %c0_i32_0 = arith.constant 0 : i32
    return %arg0, %c0_i32 : i32, i32
  }
  func.func @transform_2(%arg0: i32) -> (i32, i32) {
    %c0_i32 = arith.constant 0 : i32
    %c0_i32_0 = arith.constant 0 : i32
    return %arg0, %c0_i32 : i32, i32
  }
}

</mosaic_0001>

<llo_original>
// kernel: tpu_custom_call.1
$region0: #{tpu_custom_call.1}
  #allocation0 [shape = 'u32[]', space=smem, size = 0x4, offset = 0x4, fixed_abs, tag = 'smem constant byte address 0x4 - core index']
  #allocation1 [shape = 'u32[144,128]{1,0:T(1,128)}', space=vmem, size = 0x12000, scoped, tag = 'internal scratch']
  %s0 = inlined_call_operand.hbm [shape: f32[8,256], index: 0, kind: input, shape index: {}]
  %s1 = inlined_call_operand.hbm [shape: f32[8,256], index: 1, kind: input, shape index: {}]
  %s2 = inlined_call_operand.hbm [shape: f32[8,128], index: 2, kind: output, shape index: {}]
  %s3 = sld [smem:[#allocation0]]
  $region26: #{tpu_custom_call.1} parent=0
    _
  %s5 = ssub.s32 1, %s3
  %s6 = scalar_select 0, %s5, %s3
  $region1: #{tpu_custom_call.1} parent=0
    #allocation2 [shape = 'u8[8192]{0}', space=vmem, size = 0x2000, scoped, tag = 'input window, operand 0, single buffered']
    #allocation3 [shape = 's32[1]{0}', space=sflag, size = 0x4, scoped, tag = 'scoped memory for tpu_custom_call.1']
    #allocation4 [shape = 's32[1]{0}', space=sflag, size = 0x4, scoped, tag = 'scoped memory for tpu_custom_call.1']
    #allocation5 [shape = 'u8[8192]{0}', space=vmem, size = 0x2000, scoped, tag = 'input window, operand 1, single buffered']
    #allocation6 [shape = 's32[1]{0}', space=sflag, size = 0x4, scoped, tag = 'scoped memory for tpu_custom_call.1']
    #allocation7 [shape = 'u8[4096]{0}', space=vmem, size = 0x1000, scoped, tag = 'output window, operand 0, single buffered']
    %7 = vsyncpa [#allocation3], 0
    %8 = vsyncpa [#allocation6], 0
    %9 = vsyncpa [#allocation4], 0
    // Predicated region
    $region2: #{tpu_custom_call.1} parent=1 // pred_check
      _
    $region3: #{tpu_custom_call.1} parent=1 // pred_check_branch
      %11 = sbr.rel (0) target = $region5
    $region4: #{tpu_custom_call.1} parent=1 // pred_region
      %s13 = ssub.s32 256, 256
      %14 = vsyncadd [#allocation3], %s13
      %s16 = sshll.u32 [#allocation2], 4
      %s17 = int_to_ptr.vmem [resolvable:$true] %s16
      %19 = dma.hbm_to_vmem [thread:$0]  %s0, 256, %s17, [#allocation3]
    $region5: #{tpu_custom_call.1} parent=1 // pred_fallthru
      _
    // Predicated region
    $region6: #{tpu_custom_call.1} parent=1 // pred_check
      _
    $region7: #{tpu_custom_call.1} parent=1 // pred_check_branch
      %21 = sbr.rel (0) target = $region9
    $region8: #{tpu_custom_call.1} parent=1 // pred_region
      %s23 = ssub.s32 256, 256
      %24 = vsyncadd [#allocation6], %s23
      %s26 = sshll.u32 [#allocation5], 4
      %s27 = int_to_ptr.vmem [resolvable:$true] %s26
      %29 = dma.hbm_to_vmem [thread:$0]  %s1, 256, %s27, [#allocation6]
    $region9: #{tpu_custom_call.1} parent=1 // pred_fallthru
      _
    // Predicated region
    $region10: #{tpu_custom_call.1} parent=1 // pred_check
      _
    $region11: #{tpu_custom_call.1} parent=1 // pred_check_branch
      %31 = sbr.rel (0) target = $region13
    $region12: #{tpu_custom_call.1} parent=1 // pred_region
      %32 = dma.done [#allocation3], 256
    $region13: #{tpu_custom_call.1} parent=1 // pred_fallthru
      _
    // Predicated region
    $region14: #{tpu_custom_call.1} parent=1 // pred_check
      _
    $region15: #{tpu_custom_call.1} parent=1 // pred_check_branch
      %34 = sbr.rel (0) target = $region17
    $region16: #{tpu_custom_call.1} parent=1 // pred_region
      %35 = dma.done [#allocation6], 256
    $region17: #{tpu_custom_call.1} parent=1 // pred_fallthru
      _
    %v36 = vld [vmem:[#allocation2] sm:$0xff]
    %v37 = vld [vmem:[#allocation2 + $0x8] sm:$0xff]
    %v38 = vld [vmem:[#allocation5] sm:$0xff]
    %v39 = vld [vmem:[#allocation5 + $0x8] sm:$0xff]
    %v40 = vmax.f32 %v38, %v39
    %41 = vmax.xlane.f32.xlu0 %v40
    %v42 = vpop.xlane.xlu0 %41
    %v43 = vsub.f32 %v38, %v42
    %v44 = vsub.f32 %v39, %v42
    %v45 = vmul.f32 %v43, 0.5
    %v46 = vmul.f32 %v44, 0.5
    %v47 = vmul.f32 %v45, 1.442695
    %v48 = vpow.pop %v47
    %v49 = vmul.f32 %v46, 1.442695
    %v50 = vpow.pop %v49
    %v51 = vadd.f32 %v48, %v50
    %52 = vadd.xlane.f32.xlu0 %v51
    %v53 = vpop.xlane.xlu0 %52
    %v54 = vlog2.pop %v53
    %v55 = vmul.f32 %v54, 0.6931472
    %v56 = vmax.f32 %v36, %v37
    %57 = vmax.xlane.f32.xlu0 %v56
    %v58 = vpop.xlane.xlu0 %57
    %v59 = vsub.f32 %v36, %v58
    %v60 = vsub.f32 %v37, %v58
    %v61 = vmul.f32 %v59, 0.5
    %v62 = vmul.f32 %v60, 0.5
    %v63 = vmul.f32 %v61, 1.442695
    %v64 = vpow.pop %v63
    %v65 = vmul.f32 %v62, 1.442695
    %v66 = vpow.pop %v65
    %v67 = vadd.f32 %v64, %v66
    %68 = vadd.xlane.f32.xlu0 %v67
    %v69 = vpop.xlane.xlu0 %68
    %v70 = vlog2.pop %v69
    %v71 = vmul.f32 %v70, 0.6931472
    %v72 = vsub.f32 %v45, %v61
    %v73 = vsub.f32 %v46, %v62
    %v74 = vsub.f32 %v55, %v71
    %v75 = vsub.f32 %v72, %v74
    %v76 = vsub.f32 %v73, %v74
    %v77 = vmul.f32 %v48, %v75
    %v78 = vmul.f32 %v50, %v76
    %v79 = vadd.f32 %v77, %v78
    %80 = vadd.xlane.f32.xlu0 %v79
    %v81 = vpop.xlane.xlu0 %80
    %v82 = vrcp.pop %v53
    %v83 = vmul.f32 %v81, %v82
    %vm84 = vcmask 7168
    %v85 = vsel %vm84, %v83, 0.0
    %86 = vadd.xlane.f32.xlu0 %v85
    %v87 = vpop.xlane.xlu0 %86
    %v88 = vrot.slane %v87, 4
    %v89 = vadd.f32 %v87, %v88
    %v90 = vrot.slane %v89, 2
    %v91 = vadd.f32 %v89, %v90
    %v92 = vrot.slane %v91, 1
    %v93 = vadd.f32 %v91, %v92
    %s94 = vtos %v93
    %v95 = vstv %s94
    %96 = vst [vmem:[#allocation7] sm:$0xff] %v95
    // Predicated region
    $region18: #{tpu_custom_call.1} parent=1 // pred_check
      _
    $region19: #{tpu_custom_call.1} parent=1 // pred_check_branch
      %98 = sbr.rel (0) target = $region21
    $region20: #{tpu_custom_call.1} parent=1 // pred_region
      %s100 = ssub.s32 128, 128
      %101 = vsyncadd [#allocation4], %s100
      %s103 = sshll.u32 [#allocation7], 4
      %s104 = int_to_ptr.vmem [resolvable:$true] %s103
      %106 = dma.vmem_to_hbm [thread:$0]  %s104, 128, %s2, [#allocation4]
    $region21: #{tpu_custom_call.1} parent=1 // pred_fallthru
      _
    // Predicated region
    $region22: #{tpu_custom_call.1} parent=1 // pred_check
      _
    $region23: #{tpu_custom_call.1} parent=1 // pred_check_branch
      %108 = sbr.rel (0) target = $region25
    $region24: #{tpu_custom_call.1} parent=1 // pred_region
      %109 = dma.done [#allocation4], 128
    $region25: #{tpu_custom_call.1} parent=1 // pred_fallthru
      _
    %110 = vsyncpa [#allocation3], 1
    %111 = vsyncpa [#allocation6], 1
    %112 = vsyncpa [#allocation4], 1

</llo_original>
